<compile_context>
chip_gen: v6e
topology: v6e:2x2x1
jax: 0.10.0
libtpu: 0.0.40
codegen_flags: <defaults>
</compile_context>

<pallas_src>
import jax
import jax.numpy as jnp
from jax.experimental import pallas as pl
from jax.experimental.pallas import tpu as pltpu

_LANE = 128


def _ceil_to(a, b):
    return -(-a // b) * b


def _sublane_for(dtype):
    itemsize = jnp.dtype(dtype).itemsize
    return {4: 8, 2: 16, 1: 32}.get(itemsize, 8)


def _target_tile_bytes(total_bytes):
    # Generation-aware tile budget: v7x (64 MiB VMEM/TC, ~3.2 TB/s HBM) wants
    # bigger tiles to amortize the ~0.35us grid-step cost; 4 MiB is already
    # ~95%+ of roofline on v5e/v6e.  Then shrink so big problems keep >= ~4
    # grid blocks (v7x shards the 'parallel' axes across its two TensorCores).
    base = 4 * 1024 * 1024
    try:
        vmem = pltpu.get_tpu_info().vmem_capacity_bytes
        if vmem <= 64 * 1024 * 1024:          # v7x
            base = 8 * 1024 * 1024
    except Exception:
        pass
    quarter = total_bytes // 4
    if quarter <= 0:
        quarter = base
    return max(512 * 1024, min(base, quarter))


def _whiten_kernel(p_ref, x_ref, o_ref):
    # p_ref: (TR, 2) f32 -- column 0 = per-row mean, column 1 = per-row 1/std.
    # x_ref / o_ref: (TR, TL) in x.dtype.  Compute in f32, cast on store.
    mean = p_ref[:, 0:1]
    inv_std = p_ref[:, 1:2]
    x = x_ref[...].astype(jnp.float32)
    o_ref[...] = ((x - mean) * inv_std).astype(o_ref.dtype)


def data_whiten(x, data_mean, data_std):
    """(x - mean) / std with mean/std broadcast per channel (NCHW layout).

    x:         (N, C, H, W)
    data_mean: (C,)
    data_std:  (C,)
    """
    N, C, H, W = x.shape
    R, L = N * C, H * W
    itemsize = jnp.dtype(x.dtype).itemsize
    sublane = _sublane_for(x.dtype)

    # Per-row affine params (row r <-> channel r % C), kept in f32.
    mean_rows = jnp.tile(data_mean.astype(jnp.float32), N)            # (R,)
    inv_rows = jnp.tile(1.0 / data_std.astype(jnp.float32), N)        # (R,)
    params = jnp.stack([mean_rows, inv_rows], axis=1)                 # (R, 2) f32

    target = _target_tile_bytes(R * L * itemsize)

    # Lane axis: take the full row when it fits the budget (one contiguous DMA
    # run per block); otherwise the largest lane-multiple that still leaves at
    # least one sublane's worth of rows in the budget.
    tl_cap = max(_LANE, (target // (sublane * itemsize)) // _LANE * _LANE)
    TL = L if L <= tl_cap else tl_cap

    # Sublane axis: grow rows to fill the byte budget.
    rows_budget = max(sublane, target // (TL * itemsize))
    TR = R if R <= rows_budget else (rows_budget // sublane) * sublane

    grid = (pl.cdiv(R, TR), pl.cdiv(L, TL))

    # Sized VMEM limit: 2 pipeline buffers x (in tile + out tile) + 2 x
    # lane-padded param tile + slack.  Stays well under physical VMEM on v7x.
    tr_pad = _ceil_to(TR, sublane)
    tl_pad = _ceil_to(TL, _LANE)
    x_tile_bytes = tr_pad * tl_pad * itemsize
    p_tile_bytes = _ceil_to(TR, 8) * _LANE * 4
    vmem_limit = int(4 * x_tile_bytes + 2 * p_tile_bytes + (4 << 20))

    xf = x.reshape(R, L)

    out = pl.pallas_call(
        _whiten_kernel,
        out_shape=jax.ShapeDtypeStruct((R, L), x.dtype),
        grid=grid,
        in_specs=[
            pl.BlockSpec((TR, 2), lambda i, j: (i, 0)),    # packed mean / 1/std
            pl.BlockSpec((TR, TL), lambda i, j: (i, j)),   # x tile
        ],
        out_specs=pl.BlockSpec((TR, TL), lambda i, j: (i, j)),
        compiler_params=pltpu.CompilerParams(
            dimension_semantics=("parallel", "parallel"),
            vmem_limit_bytes=vmem_limit,
        ),
    )(params, xf)

    return out.reshape(N, C, H, W)


if __name__ == "__main__":
    key = jax.random.PRNGKey(0)

    # Module hard-codes 3 channels (mean/std reshaped to (3,1,1) in PyTorch).
    N, C, H, W = 2, 3, 16, 16
    x = jax.random.normal(key, (N, C, H, W), dtype=jnp.float32)

    # Deterministic "buffers" (ImageNet-style stats), set in-script.
    data_mean = jnp.array([0.485, 0.456, 0.406], dtype=jnp.float32)
    data_std = jnp.array([0.229, 0.224, 0.225], dtype=jnp.float32)

    out = data_whiten(x, data_mean, data_std)
    out = jax.block_until_ready(out)

    # Reference: plain JAX broadcasting, same semantics as the PyTorch module.
    ref = (x - data_mean.reshape(1, C, 1, 1)) / data_std.reshape(1, C, 1, 1)
    assert out.shape == ref.shape
    assert out.dtype == ref.dtype
    assert jnp.allclose(out, ref, atol=1e-5, rtol=1e-5), "mismatch vs reference"

    print("KERNEL_OK")
</pallas_src>

<mosaic_0001>
module attributes {stable_mosaic.version = 11 : i64} {
  func.func @_whiten_kernel(%arg0: i32, %arg1: i32, %arg2: memref<6x2xf32, #tpu.memory_space<vmem>>, %arg3: memref<6x256xf32, #tpu.memory_space<vmem>>, %arg4: memref<6x256xf32, #tpu.memory_space<vmem>>) attributes {dimension_semantics = [#tpu.dimension_semantics<parallel>, #tpu.dimension_semantics<parallel>], iteration_bounds = array<i64: 1, 1>, scalar_prefetch = 0 : i64, scratch_operands = 0 : i64, tpu.core_type = #tpu.core_type<tc>, window_params = [{transform_indices = @transform_0, window_bounds = array<i64: 6, 2>}, {transform_indices = @transform_1, window_bounds = array<i64: 6, 256>}, {transform_indices = @transform_2, window_bounds = array<i64: 6, 256>}]} {
    %c0 = arith.constant 0 : index
    %c0_0 = arith.constant 0 : index
    %0 = vector.load %arg2[%c0, %c0_0] : memref<6x2xf32, #tpu.memory_space<vmem>>, vector<6x1xf32>
    %c0_1 = arith.constant 0 : index
    %c1 = arith.constant 1 : index
    %1 = vector.load %arg2[%c0_1, %c1] : memref<6x2xf32, #tpu.memory_space<vmem>>, vector<6x1xf32>
    %c0_2 = arith.constant 0 : index
    %c0_3 = arith.constant 0 : index
    %2 = vector.load %arg3[%c0_2, %c0_3] : memref<6x256xf32, #tpu.memory_space<vmem>>, vector<6x256xf32>
    %3 = vector.broadcast %0 : vector<6x1xf32> to vector<6x256xf32>
    %4 = arith.subf %2, %3 : vector<6x256xf32>
    %5 = vector.broadcast %1 : vector<6x1xf32> to vector<6x256xf32>
    %6 = arith.mulf %4, %5 : vector<6x256xf32>
    %c0_4 = arith.constant 0 : index
    %c0_5 = arith.constant 0 : index
    %7 = vector.load %arg4[%c0_4, %c0_5] : memref<6x256xf32, #tpu.memory_space<vmem>>, vector<6x256xf32>
    tpu.vector_store %arg4[%c0_4, %c0_5], %6 {strides = array<i32>} : memref<6x256xf32, #tpu.memory_space<vmem>>, vector<6x256xf32>,
    return
  }
  func.func @transform_0(%arg0: i32, %arg1: i32) -> (i32, i32) {
    %c0_i32 = arith.constant 0 : i32
    %c0_i32_0 = arith.constant 0 : i32
    return %arg0, %c0_i32 : i32, i32
  }
  func.func @transform_1(%arg0: i32, %arg1: i32) -> (i32, i32) {
    %c0_i32 = arith.constant 0 : i32
    return %arg0, %arg1 : i32, i32
  }
  func.func @transform_2(%arg0: i32, %arg1: i32) -> (i32, i32) {
    %c0_i32 = arith.constant 0 : i32
    return %arg0, %arg1 : i32, i32
  }
}

</mosaic_0001>

<llo_original>
// kernel: tpu_custom_call.1
$region0: #{tpu_custom_call.1}
  #allocation0 [shape = 'u32[]', space=smem, size = 0x4, offset = 0x4, fixed_abs, tag = 'smem constant byte address 0x4 - core index']
  #allocation1 [shape = 'u32[144,128]{1,0:T(1,128)}', space=vmem, size = 0x12000, scoped, tag = 'internal scratch']
  %s0 = inlined_call_operand.vmem [shape: f32[6,2], index: 0, kind: input, shape index: {}]
  %s1 = inlined_call_operand.hbm [shape: f32[6,256], index: 1, kind: input, shape index: {}]
  %s2 = inlined_call_operand.hbm [shape: f32[6,256], index: 2, kind: output, shape index: {}]
  %s3 = sld [smem:[#allocation0]]
  $region22: #{tpu_custom_call.1} parent=0
    _
  %s5 = ssub.s32 1, %s3
  %s6 = scalar_select 0, %s5, %s3
  $region1: #{tpu_custom_call.1} parent=0
    #allocation2 [shape = 'u8[8192]{0}', space=vmem, size = 0x2000, scoped, tag = 'input window, operand 1, single buffered']
    #allocation3 [shape = 's32[1]{0}', space=sflag, size = 0x4, scoped, tag = 'scoped memory for tpu_custom_call.1']
    #allocation4 [shape = 's32[1]{0}', space=sflag, size = 0x4, scoped, tag = 'scoped memory for tpu_custom_call.1']
    #allocation5 [shape = 'u8[8192]{0}', space=vmem, size = 0x2000, scoped, tag = 'output window, operand 0, single buffered']
    %7 = vsyncpa [#allocation3], 0
    %8 = vsyncpa [#allocation4], 0
    // Predicated region
    $region2: #{tpu_custom_call.1} parent=1 // pred_check
      _
    $region3: #{tpu_custom_call.1} parent=1 // pred_check_branch
      %10 = sbr.rel (0) target = $region5
    $region4: #{tpu_custom_call.1} parent=1 // pred_region
      _
    $region5: #{tpu_custom_call.1} parent=1 // pred_fallthru
      _
    // Predicated region
    $region6: #{tpu_custom_call.1} parent=1 // pred_check
      _
    $region7: #{tpu_custom_call.1} parent=1 // pred_check_branch
      %12 = sbr.rel (0) target = $region9
    $region8: #{tpu_custom_call.1} parent=1 // pred_region
      %s14 = ssub.s32 256, 256
      %15 = vsyncadd [#allocation3], %s14
      %s17 = sshll.u32 [#allocation2], 4
      %s18 = int_to_ptr.vmem [resolvable:$true] %s17
      %20 = dma.hbm_to_vmem [thread:$0]  %s1, 256, %s18, [#allocation3]
    $region9: #{tpu_custom_call.1} parent=1 // pred_fallthru
      _
    // Predicated region
    $region10: #{tpu_custom_call.1} parent=1 // pred_check
      _
    $region11: #{tpu_custom_call.1} parent=1 // pred_check_branch
      %22 = sbr.rel (0) target = $region13
    $region12: #{tpu_custom_call.1} parent=1 // pred_region
      %23 = dma.done [#allocation3], 256
    $region13: #{tpu_custom_call.1} parent=1 // pred_fallthru
      _
    %v24 = vld [vmem:[%s0] sm:$0x3f]
    %v25 = vld [vmem:[#allocation2] sm:$0x3f]
    %v26 = vld [vmem:[#allocation2 + $0x8] sm:$0x3f]
    %28 = vset.pattern.permute.xlu0 0
    %29 = vperm.xlu0 %28, %v24
    %v30 = vpop.permute.xlu0 %29
    %v32 = vsub.f32 %v25, %v30
    %v33 = vsub.f32 %v26, %v30
    %34 = vset.pattern.permute.xlu0 1
    %35 = vperm.xlu0 %34, %v24
    %v36 = vpop.permute.xlu0 %35
    %v38 = vmul.f32 %v32, %v36
    %v39 = vmul.f32 %v33, %v36
    %40 = vst [vmem:[#allocation5] sm:$0x3f] %v38
    %41 = vst [vmem:[#allocation5 + $0x8] sm:$0x3f] %v39
    // Predicated region
    $region14: #{tpu_custom_call.1} parent=1 // pred_check
      _
    $region15: #{tpu_custom_call.1} parent=1 // pred_check_branch
      %43 = sbr.rel (0) target = $region17
    $region16: #{tpu_custom_call.1} parent=1 // pred_region
      %s45 = ssub.s32 256, 256
      %46 = vsyncadd [#allocation4], %s45
      %s48 = sshll.u32 [#allocation5], 4
      %s49 = int_to_ptr.vmem [resolvable:$true] %s48
      %51 = dma.vmem_to_hbm [thread:$0]  %s49, 256, %s2, [#allocation4]
    $region17: #{tpu_custom_call.1} parent=1 // pred_fallthru
      _
    // Predicated region
    $region18: #{tpu_custom_call.1} parent=1 // pred_check
      _
    $region19: #{tpu_custom_call.1} parent=1 // pred_check_branch
      %53 = sbr.rel (0) target = $region21
    $region20: #{tpu_custom_call.1} parent=1 // pred_region
      %54 = dma.done [#allocation4], 256
    $region21: #{tpu_custom_call.1} parent=1 // pred_fallthru
      _
    %55 = vsyncpa [#allocation3], 1
    %56 = vsyncpa [#allocation4], 1

</llo_original>
